<compile_context>
chip_gen: v7x
topology: tpu7x:2x2x1
jax: 0.10.0
libtpu: 0.0.40
codegen_flags: <defaults>
</compile_context>

<pallas_src>
import functools

import jax
import jax.numpy as jnp
from jax.experimental import pallas as pl
from jax.experimental.pallas import tpu as pltpu


def _pnet_attention_kernel(
    hi_ref, hj_ref, wit_ref, wcat_ref, bi_ref, bj_ref, out_ref, *, d_out
):
    """One (row_tile, D) output block.

    hi_ref, hj_ref : (row_tile, C)  node-feature tiles (compute dtype)
    wit_ref        : (C, D)   top half of W_i (acts on h_i)
    wcat_ref       : (C, 2D)  [W_i_bot | W_j]  (acts on h_j, one wide matmul)
    bi_ref, bj_ref : (1, D)   f32 biases
    """
    hi = hi_ref[...]
    hj = hj_ref[...]

    # Single wide MXU matmul for h_j against [W_i_bot | W_j] -> (rows, 2D), f32.
    hj_mix = jnp.dot(hj, wcat_ref[...], preferred_element_type=jnp.float32)

    # net_i(cat([h_i, h_j], dim=1)) == h_i @ W_i_top + h_j @ W_i_bot + b_i
    logits = (
        jnp.dot(hi, wit_ref[...], preferred_element_type=jnp.float32)
        + hj_mix[:, :d_out]
        + bi_ref[...]
    )

    # Softmax over the feature dim (torch dim=1), numerically stable, f32.
    m = jnp.max(logits, axis=-1, keepdims=True)
    e = jnp.exp(logits - m)
    attn = e * pl.reciprocal(jnp.sum(e, axis=-1, keepdims=True), approx=True)

    # net_j(h_j)
    vj = hj_mix[:, d_out:] + bj_ref[...]

    out_ref[...] = (attn * vj).astype(out_ref.dtype)


def _round_up(x, m):
    return ((x + m - 1) // m) * m


def _default_row_tile(n):
    if n <= 256:
        return n  # single block; too small to split profitably
    # >= 2 grid steps for N > 256 (v7x has 2 TensorCores), capped at 2048 rows;
    # multiples of 16 keep bf16 sublane packing clean.
    return min(2048, _round_up(pl.cdiv(n, 2), 16))


def potentialnet_attention(
    h_i, h_j, w_i, b_i, w_j, b_j, *, row_tile=None, compute_dtype=None
):
    """Fused forward: softmax(cat(h_i,h_j) @ W_i + b_i, axis=1) * (h_j @ W_j + b_j)."""
    N, C = h_i.shape
    assert h_j.shape == (N, C)
    twoC, D = w_i.shape
    assert twoC == 2 * C and w_j.shape == (C, D)
    assert b_i.shape == (D,) and b_j.shape == (D,)

    out_dtype = h_i.dtype
    mm_dtype = jnp.dtype(compute_dtype) if compute_dtype is not None else jnp.dtype(out_dtype)

    # Matmul operands in the (possibly reduced-precision) compute dtype; the
    # concat along dim=1 is removed algebraically and W_i_bot / W_j are fused
    # column-wise so h_j feeds one wide matmul. Biases stay f32 (added post-acc).
    hi = h_i.astype(mm_dtype)
    hj = h_j.astype(mm_dtype)
    w_i_top = w_i[:C].astype(mm_dtype)                               # (C, D)
    w_cat = jnp.concatenate([w_i[C:], w_j], axis=1).astype(mm_dtype)  # (C, 2D)
    b_i2 = b_i.reshape(1, D).astype(jnp.float32)
    b_j2 = b_j.reshape(1, D).astype(jnp.float32)

    if row_tile is None:
        row_tile = _default_row_tile(N)
    row_tile = min(row_tile, N)
    if row_tile < N:
        assert row_tile % 8 == 0, "row tile must be a multiple of 8 when N is tiled"
    grid = (pl.cdiv(N, row_tile),)  # last block may be partial (rows independent)

    in_itemsize = jnp.dtype(mm_dtype).itemsize
    out_itemsize = jnp.dtype(out_dtype).itemsize
    weight_bytes = 3 * C * D * in_itemsize + 2 * D * 4

    # Grid-invariant weights: single-buffer only when they are large enough for
    # the reclaimed VMEM to matter (keeps small/common shapes on the default path).
    big_weights = weight_bytes > (4 << 20)

    def _const_spec(shape):
        if big_weights:
            return pl.BlockSpec(shape, lambda i: (0, 0), pipeline_mode=pl.Buffered(1))
        return pl.BlockSpec(shape, lambda i: (0, 0))

    in_specs = [
        pl.BlockSpec((row_tile, C), lambda i: (i, 0)),  # h_i
        pl.BlockSpec((row_tile, C), lambda i: (i, 0)),  # h_j
        _const_spec((C, D)),                            # W_i top half   - resident
        _const_spec((C, 2 * D)),                        # [W_i_bot | W_j]- resident
        _const_spec((1, D)),                            # b_i            - resident
        _const_spec((1, D)),                            # b_j            - resident
    ]
    out_specs = pl.BlockSpec((row_tile, D), lambda i: (i, 0))

    # VMEM working-set estimate: double-buffered h tiles + output, resident
    # weights (x2 unless single-buffered), plus f32 intermediates
    # (hj_mix is 2D wide; logits/e/attn/vj are D wide).
    w_bufs = 1 if big_weights else 2
    est_bytes = (
        2 * 2 * row_tile * C * in_itemsize      # h_i, h_j (double-buffered)
        + 2 * row_tile * D * out_itemsize       # output   (double-buffered)
        + w_bufs * weight_bytes                 # weights + biases
        + 6 * row_tile * D * 4                  # f32 intermediates
    )
    try:
        vmem_cap = pltpu.get_tpu_info().vmem_capacity_bytes
    except Exception:  # pragma: no cover - conservative fallback (v7x-safe)
        vmem_cap = 64 << 20
    budget = (vmem_cap * 3) // 4
    vmem_limit = int(min(budget, max(32 << 20, 2 * est_bytes)))

    cost = pl.CostEstimate(
        flops=2 * N * C * 3 * D,          # hi@(C,D) + hj@(C,2D)
        transcendentals=N * D,            # exp (+ N approx reciprocals)
        bytes_accessed=(
            2 * N * C * in_itemsize + N * D * out_itemsize + weight_bytes
        ),
    )

    kernel = functools.partial(_pnet_attention_kernel, d_out=D)

    return pl.pallas_call(
        kernel,
        out_shape=jax.ShapeDtypeStruct((N, D), out_dtype),
        grid_spec=pltpu.PrefetchScalarGridSpec(
            num_scalar_prefetch=0,
            grid=grid,
            in_specs=in_specs,
            out_specs=out_specs,
        ),
        compiler_params=pltpu.CompilerParams(
            dimension_semantics=("parallel",),
            vmem_limit_bytes=vmem_limit,
        ),
        cost_estimate=cost,
    )(hi, hj, w_i_top, w_cat, b_i2, b_j2)


if __name__ == "__main__":
    # Small deterministic example. N deliberately NOT a multiple of the row tile
    # (exercises the cdiv grid + partial last block) and > 256 (exercises the
    # multi-step / two-TensorCore path).
    N, C, D = 300, 64, 128

    key = jax.random.PRNGKey(0)
    k1, k2, k3, k4, k5, k6 = jax.random.split(key, 6)
    h_i = jax.random.normal(k1, (N, C), dtype=jnp.float32)
    h_j = jax.random.normal(k2, (N, C), dtype=jnp.float32)
    w_i = jax.random.normal(k3, (2 * C, D), dtype=jnp.float32) * 0.1
    b_i = jax.random.normal(k4, (D,), dtype=jnp.float32) * 0.1
    w_j = jax.random.normal(k5, (C, D), dtype=jnp.float32) * 0.1
    b_j = jax.random.normal(k6, (D,), dtype=jnp.float32) * 0.1

    # Pure-JAX reference mirroring the torch forward exactly.
    cat = jnp.concatenate([h_i, h_j], axis=1)
    ref = jax.nn.softmax(cat @ w_i + b_i, axis=1) * (h_j @ w_j + b_j)

    # f32 path.
    out = potentialnet_attention(h_i, h_j, w_i, b_i, w_j, b_j)
    out = jax.block_until_ready(out)
    assert out.shape == (N, D)
    assert jnp.allclose(out, ref, atol=2e-3, rtol=2e-2), "f32 mismatch vs reference"

    # bf16 matmul path (halves HBM traffic); compare against a bf16-cast reference.
    out_bf16 = potentialnet_attention(
        h_i, h_j, w_i, b_i, w_j, b_j, compute_dtype=jnp.bfloat16
    )
    out_bf16 = jax.block_until_ready(out_bf16)
    hib = h_i.astype(jnp.bfloat16).astype(jnp.float32)
    hjb = h_j.astype(jnp.bfloat16).astype(jnp.float32)
    wib = w_i.astype(jnp.bfloat16).astype(jnp.float32)
    wjb = w_j.astype(jnp.bfloat16).astype(jnp.float32)
    catb = jnp.concatenate([hib, hjb], axis=1)
    refb = jax.nn.softmax(catb @ wib + b_i, axis=1) * (hjb @ wjb + b_j)
    assert jnp.allclose(out_bf16, refb, atol=1e-2, rtol=5e-2), "bf16 mismatch vs reference"

    print("KERNEL_OK")
</pallas_src>

<mosaic_0001>
module attributes {stable_mosaic.version = 11 : i64} {
  func.func @_pnet_attention_kernel(%arg0: i32, %arg1: memref<160x64xf32, #tpu.memory_space<vmem>>, %arg2: memref<160x64xf32, #tpu.memory_space<vmem>>, %arg3: memref<64x128xf32, #tpu.memory_space<vmem>>, %arg4: memref<64x256xf32, #tpu.memory_space<vmem>>, %arg5: memref<1x128xf32, #tpu.memory_space<vmem>>, %arg6: memref<1x128xf32, #tpu.memory_space<vmem>>, %arg7: memref<160x128xf32, #tpu.memory_space<vmem>>) attributes {dimension_semantics = [#tpu.dimension_semantics<parallel>], iteration_bounds = array<i64: 2>, scalar_prefetch = 0 : i64, scratch_operands = 0 : i64, tpu.core_type = #tpu.core_type<tc>, window_params = [{transform_indices = @transform_0, window_bounds = array<i64: 160, 64>}, {transform_indices = @transform_1, window_bounds = array<i64: 160, 64>}, {pipeline_mode = #tpu.pipeline_mode<synchronous>, transform_indices = @transform_2, window_bounds = array<i64: 64, 128>}, {pipeline_mode = #tpu.pipeline_mode<synchronous>, transform_indices = @transform_3, window_bounds = array<i64: 64, 256>}, {pipeline_mode = #tpu.pipeline_mode<synchronous>, transform_indices = @transform_4, window_bounds = array<i64: 1, 128>}, {pipeline_mode = #tpu.pipeline_mode<synchronous>, transform_indices = @transform_5, window_bounds = array<i64: 1, 128>}, {transform_indices = @transform_6, window_bounds = array<i64: 160, 128>}]} {
    %c0 = arith.constant 0 : index
    %c0_0 = arith.constant 0 : index
    %0 = vector.load %arg1[%c0, %c0_0] : memref<160x64xf32, #tpu.memory_space<vmem>>, vector<160x64xf32>
    %c0_1 = arith.constant 0 : index
    %c0_2 = arith.constant 0 : index
    %1 = vector.load %arg2[%c0_1, %c0_2] : memref<160x64xf32, #tpu.memory_space<vmem>>, vector<160x64xf32>
    %c0_3 = arith.constant 0 : index
    %c0_4 = arith.constant 0 : index
    %2 = vector.load %arg4[%c0_3, %c0_4] : memref<64x256xf32, #tpu.memory_space<vmem>>, vector<64x256xf32>
    %cst = arith.constant dense<0.000000e+00> : vector<160x256xf32>
    %3 = tpu.matmul %1, %2, %cst {dimension_numbers = #tpu.dot_dimension_numbers<[1], [0], [0], [1], [0, 0, 1, 1], [], []>} : vector<160x64xf32>, vector<64x256xf32>, vector<160x256xf32> -> vector<160x256xf32>
    %c0_5 = arith.constant 0 : index
    %c0_6 = arith.constant 0 : index
    %4 = vector.load %arg3[%c0_5, %c0_6] : memref<64x128xf32, #tpu.memory_space<vmem>>, vector<64x128xf32>
    %cst_7 = arith.constant dense<0.000000e+00> : vector<160x128xf32>
    %5 = tpu.matmul %0, %4, %cst_7 {dimension_numbers = #tpu.dot_dimension_numbers<[1], [0], [0], [1], [0, 0, 1, 1], [], []>} : vector<160x64xf32>, vector<64x128xf32>, vector<160x128xf32> -> vector<160x128xf32>
    %6 = vector.extract_strided_slice %3 {offsets = [0, 0], sizes = [160, 128], strides = [1, 1]} : vector<160x256xf32> to vector<160x128xf32>
    %7 = arith.addf %5, %6 : vector<160x128xf32>
    %c0_8 = arith.constant 0 : index
    %c0_9 = arith.constant 0 : index
    %8 = vector.load %arg5[%c0_8, %c0_9] : memref<1x128xf32, #tpu.memory_space<vmem>>, vector<1x128xf32>
    %9 = vector.broadcast %8 : vector<1x128xf32> to vector<160x128xf32>
    %10 = arith.addf %7, %9 : vector<160x128xf32>
    %cst_10 = arith.constant dense<0xFF800000> : vector<160xf32>
    %11 = vector.multi_reduction <maximumf>, %10, %cst_10 [1] : vector<160x128xf32> to vector<160xf32>
    %12 = vector.shape_cast %11 : vector<160xf32> to vector<160x1xf32>
    %13 = vector.broadcast %12 : vector<160x1xf32> to vector<160x128xf32>
    %14 = arith.subf %10, %13 : vector<160x128xf32>
    %15 = math.exp %14 : vector<160x128xf32>
    %cst_11 = arith.constant dense<0.000000e+00> : vector<160xf32>
    %16 = vector.multi_reduction <add>, %15, %cst_11 [1] : vector<160x128xf32> to vector<160xf32>
    %17 = vector.shape_cast %16 : vector<160xf32> to vector<160x1xf32>
    %18 = tpu.reciprocal %17 {approx = true} : vector<160x1xf32> -> vector<160x1xf32>
    %19 = vector.broadcast %18 : vector<160x1xf32> to vector<160x128xf32>
    %20 = arith.mulf %15, %19 : vector<160x128xf32>
    %21 = vector.extract_strided_slice %3 {offsets = [0, 128], sizes = [160, 128], strides = [1, 1]} : vector<160x256xf32> to vector<160x128xf32>
    %c0_12 = arith.constant 0 : index
    %c0_13 = arith.constant 0 : index
    %22 = vector.load %arg6[%c0_12, %c0_13] : memref<1x128xf32, #tpu.memory_space<vmem>>, vector<1x128xf32>
    %23 = vector.broadcast %22 : vector<1x128xf32> to vector<160x128xf32>
    %24 = arith.addf %21, %23 : vector<160x128xf32>
    %25 = arith.mulf %20, %24 : vector<160x128xf32>
    %c0_14 = arith.constant 0 : index
    %c0_15 = arith.constant 0 : index
    %26 = vector.load %arg7[%c0_14, %c0_15] : memref<160x128xf32, #tpu.memory_space<vmem>>, vector<160x128xf32>
    tpu.vector_store %arg7[%c0_14, %c0_15], %25 {strides = array<i32>} : memref<160x128xf32, #tpu.memory_space<vmem>>, vector<160x128xf32>,
    return
  }
  func.func @transform_0(%arg0: i32) -> (i32, i32) {
    %c0_i32 = arith.constant 0 : i32
    %c0_i32_0 = arith.constant 0 : i32
    return %arg0, %c0_i32 : i32, i32
  }
  func.func @transform_1(%arg0: i32) -> (i32, i32) {
    %c0_i32 = arith.constant 0 : i32
    %c0_i32_0 = arith.constant 0 : i32
    return %arg0, %c0_i32 : i32, i32
  }
  func.func @transform_2(%arg0: i32) -> (i32, i32) {
    %c0_i32 = arith.constant 0 : i32
    %c0_i32_0 = arith.constant 0 : i32
    %c0_i32_1 = arith.constant 0 : i32
    return %c0_i32, %c0_i32_0 : i32, i32
  }
  func.func @transform_3(%arg0: i32) -> (i32, i32) {
    %c0_i32 = arith.constant 0 : i32
    %c0_i32_0 = arith.constant 0 : i32
    %c0_i32_1 = arith.constant 0 : i32
    return %c0_i32, %c0_i32_0 : i32, i32
  }
  func.func @transform_4(%arg0: i32) -> (i32, i32) {
    %c0_i32 = arith.constant 0 : i32
    %c0_i32_0 = arith.constant 0 : i32
    %c0_i32_1 = arith.constant 0 : i32
    return %c0_i32, %c0_i32_0 : i32, i32
  }
  func.func @transform_5(%arg0: i32) -> (i32, i32) {
    %c0_i32 = arith.constant 0 : i32
    %c0_i32_0 = arith.constant 0 : i32
    %c0_i32_1 = arith.constant 0 : i32
    return %c0_i32, %c0_i32_0 : i32, i32
  }
  func.func @transform_6(%arg0: i32) -> (i32, i32) {
    %c0_i32 = arith.constant 0 : i32
    %c0_i32_0 = arith.constant 0 : i32
    return %arg0, %c0_i32 : i32, i32
  }
}

</mosaic_0001>

<llo_original>
// kernel: tpu_custom_call.1
$region0: #{tpu_custom_call.1}
  #allocation0 [shape = 'u32[]', space=smem, size = 0x4, offset = 0x4, fixed_abs, tag = 'smem constant byte address 0x4 - core index']
  #allocation1 [shape = 'u32[144,128]{1,0:T(1,128)}', space=vmem, size = 0x12000, scoped, tag = 'internal scratch']
  %s0 = inlined_call_operand.vmem [shape: f32[300,64], index: 0, kind: input, shape index: {}]
  %s1 = inlined_call_operand.vmem [shape: f32[300,64], index: 1, kind: input, shape index: {}]
  %s2 = inlined_call_operand.vmem [shape: f32[64,128], index: 2, kind: input, shape index: {}]
  %s3 = inlined_call_operand.vmem [shape: f32[64,256], index: 3, kind: input, shape index: {}]
  %s4 = inlined_call_operand.vmem [shape: f32[1,128], index: 4, kind: input, shape index: {}]
  %s5 = inlined_call_operand.vmem [shape: f32[1,128], index: 5, kind: input, shape index: {}]
  %s6 = inlined_call_operand.hbm [shape: f32[300,128], index: 6, kind: output, shape index: {}]
  %s7 = sld [smem:[#allocation0]]
  $region57: #{tpu_custom_call.1} parent=0
    _
  %s9 = ssub.s32 1, %s7
  %s10 = scalar_select 0, %s9, %s7
  $region1: #{tpu_custom_call.1} parent=0
    #allocation2 [shape = 'u8[163840]{0}', space=vmem, size = 0x28000, scoped, tag = 'output window, operand 0']
    #allocation3 [shape = 's32[2]{0}', space=sflag, size = 0x8, scoped, tag = 'scoped memory for tpu_custom_call.1']
    %11 = vsyncpa [#allocation3], 0
    %s12 = scalar_lea.sflag [#allocation3], 1
    %13 = vsyncpa %s12, 0
    loop: start=0, step=1, limit=4
    $region2: #{tpu_custom_call.1} parent=1 // loop_pre_header
      _
    $region3: #{tpu_custom_call.1} parent=1 // loop_header
      %s15 = sphi 0, %s19
      %p16 = scmp.ge.s32.totalorder %s15, 4
      %s25 = sphi 0, %s27
      %s28 = sphi 0, %s25
      %s29 = sphi 0, %s28
      %s45 = sphi 0, %s29
      %s51 = sphi 0, %s53
      %s54 = sphi 0, %s51
      %s55 = sphi 0, %s54
      %s71 = sphi 0, %s55
      %s75 = sphi 0, %s75
      %s77 = sphi 0, %s75
      %s78 = sphi 0, %s77
      %s92 = sphi 0, %s78
      %s96 = sphi 0, %s96
      %s98 = sphi 0, %s96
      %s99 = sphi 0, %s98
      %s113 = sphi 0, %s99
      %s117 = sphi 0, %s117
      %s119 = sphi 0, %s117
      %s120 = sphi 0, %s119
      %s134 = sphi 0, %s120
      %s138 = sphi 0, %s138
      %s140 = sphi 0, %s138
      %s141 = sphi 0, %s140
      %s155 = sphi 0, %s141
      %s161 = sphi 0, %s163
      %s164 = sphi 0, %s161
      %s165 = sphi 0, %s164
      %s181 = sphi 0, %s165
    $region4: #{tpu_custom_call.1} parent=1 // loop_header_branch
      %18 = sbr.rel (%p16) target = $region8
    $region5: #{tpu_custom_call.1} parent=1 // loop_body
      %s20 = ssub.s32 %s15, 1
      %s21 = ssub.s32 %s15, 2
      %s22 = sadd.s32 %s15, 1
      %s23 = ssub.s32 %s15, %s22
      %p24 = scmp.eq.s32.totalorder %s23, 0
      %s26 = sadd.s32 %s25, 1
      %s27 = scalar_select %p24, %s25, %s26
      %p30 = pneg %p24
      %p31 = scmp.eq.s32.totalorder %s15, 1
      %p32 = por %p30, %p31
      %p33 = scmp.ne.s32.totalorder %s25, %s28
      %p34 = scmp.eq.s32.totalorder %s15, 0
      %p35 = por %p33, %p34
      %p36 = scmp.ne.s32.totalorder %s25, %s28
      %p37 = scmp.eq.s32.totalorder %s20, 1
      %p38 = por %p36, %p37
      %p39 = scmp.ne.s32.totalorder %s28, %s29
      %p40 = scmp.eq.s32.totalorder %s20, 0
      %p41 = por %p39, %p40
      %p42 = scmp.ne.s32.totalorder %s28, %s29
      %p43 = scmp.eq.s32.totalorder %s21, 1
      %p44 = por %p42, %p43
      %p46 = scmp.ne.s32.totalorder %s29, %s45
      %p47 = scmp.eq.s32.totalorder %s21, 0
      %p48 = por %p46, %p47
      %s49 = ssub.s32 %s15, %s22
      %p50 = scmp.eq.s32.totalorder %s49, 0
      %s52 = sadd.s32 %s51, 1
      %s53 = scalar_select %p50, %s51, %s52
      %p56 = pneg %p50
      %p57 = scmp.eq.s32.totalorder %s15, 1
      %p58 = por %p56, %p57
      %p59 = scmp.ne.s32.totalorder %s51, %s54
      %p60 = scmp.eq.s32.totalorder %s15, 0
      %p61 = por %p59, %p60
      %p62 = scmp.ne.s32.totalorder %s51, %s54
      %p63 = scmp.eq.s32.totalorder %s20, 1
      %p64 = por %p62, %p63
      %p65 = scmp.ne.s32.totalorder %s54, %s55
      %p66 = scmp.eq.s32.totalorder %s20, 0
      %p67 = por %p65, %p66
      %p68 = scmp.ne.s32.totalorder %s54, %s55
      %p69 = scmp.eq.s32.totalorder %s21, 1
      %p70 = por %p68, %p69
      %p72 = scmp.ne.s32.totalorder %s55, %s71
      %p73 = scmp.eq.s32.totalorder %s21, 0
      %p74 = por %p72, %p73
      %s76 = sadd.s32 %s75, 1
      %p79 = scmp.eq.s32.totalorder %s15, 1
      %p80 = scmp.ne.s32.totalorder %s75, %s77
      %p81 = scmp.eq.s32.totalorder %s15, 0
      %p82 = por %p80, %p81
      %p83 = scmp.ne.s32.totalorder %s75, %s77
      %p84 = scmp.eq.s32.totalorder %s20, 1
      %p85 = por %p83, %p84
      %p86 = scmp.ne.s32.totalorder %s77, %s78
      %p87 = scmp.eq.s32.totalorder %s20, 0
      %p88 = por %p86, %p87
      %p89 = scmp.ne.s32.totalorder %s77, %s78
      %p90 = scmp.eq.s32.totalorder %s21, 1
      %p91 = por %p89, %p90
      %p93 = scmp.ne.s32.totalorder %s78, %s92
      %p94 = scmp.eq.s32.totalorder %s21, 0
      %p95 = por %p93, %p94
      %s97 = sadd.s32 %s96, 1
      %p100 = scmp.eq.s32.totalorder %s15, 1
      %p101 = scmp.ne.s32.totalorder %s96, %s98
      %p102 = scmp.eq.s32.totalorder %s15, 0
      %p103 = por %p101, %p102
      %p104 = scmp.ne.s32.totalorder %s96, %s98
      %p105 = scmp.eq.s32.totalorder %s20, 1
      %p106 = por %p104, %p105
      %p107 = scmp.ne.s32.totalorder %s98, %s99
      %p108 = scmp.eq.s32.totalorder %s20, 0
      %p109 = por %p107, %p108
      %p110 = scmp.ne.s32.totalorder %s98, %s99
      %p111 = scmp.eq.s32.totalorder %s21, 1
      %p112 = por %p110, %p111
      %p114 = scmp.ne.s32.totalorder %s99, %s113
      %p115 = scmp.eq.s32.totalorder %s21, 0
      %p116 = por %p114, %p115
      %s118 = sadd.s32 %s117, 1
      %p121 = scmp.eq.s32.totalorder %s15, 1
      %p122 = scmp.ne.s32.totalorder %s117, %s119
      %p123 = scmp.eq.s32.totalorder %s15, 0
      %p124 = por %p122, %p123
      %p125 = scmp.ne.s32.totalorder %s117, %s119
      %p126 = scmp.eq.s32.totalorder %s20, 1
      %p127 = por %p125, %p126
      %p128 = scmp.ne.s32.totalorder %s119, %s120
      %p129 = scmp.eq.s32.totalorder %s20, 0
      %p130 = por %p128, %p129
      %p131 = scmp.ne.s32.totalorder %s119, %s120
      %p132 = scmp.eq.s32.totalorder %s21, 1
      %p133 = por %p131, %p132
      %p135 = scmp.ne.s32.totalorder %s120, %s134
      %p136 = scmp.eq.s32.totalorder %s21, 0
      %p137 = por %p135, %p136
      %s139 = sadd.s32 %s138, 1
      %p142 = scmp.eq.s32.totalorder %s15, 1
      %p143 = scmp.ne.s32.totalorder %s138, %s140
      %p144 = scmp.eq.s32.totalorder %s15, 0
      %p145 = por %p143, %p144
      %p146 = scmp.ne.s32.totalorder %s138, %s140
      %p147 = scmp.eq.s32.totalorder %s20, 1
      %p148 = por %p146, %p147
      %p149 = scmp.ne.s32.totalorder %s140, %s141
      %p150 = scmp.eq.s32.totalorder %s20, 0
      %p151 = por %p149, %p150
      %p152 = scmp.ne.s32.totalorder %s140, %s141
      %p153 = scmp.eq.s32.totalorder %s21, 1
      %p154 = por %p152, %p153
      %p156 = scmp.ne.s32.totalorder %s141, %s155
      %p157 = scmp.eq.s32.totalorder %s21, 0
      %p158 = por %p156, %p157
      %s159 = ssub.s32 %s15, %s22
      %p160 = scmp.eq.s32.totalorder %s159, 0
      %s162 = sadd.s32 %s161, 1
      %s163 = scalar_select %p160, %s161, %s162
      %p166 = pneg %p160
      %p167 = scmp.eq.s32.totalorder %s15, 1
      %p168 = por %p166, %p167
      %p169 = scmp.ne.s32.totalorder %s161, %s164
      %p170 = scmp.eq.s32.totalorder %s15, 0
      %p171 = por %p169, %p170
      %p172 = scmp.ne.s32.totalorder %s161, %s164
      %p173 = scmp.eq.s32.totalorder %s20, 1
      %p174 = por %p172, %p173
      %p175 = scmp.ne.s32.totalorder %s164, %s165
      %p176 = scmp.eq.s32.totalorder %s20, 0
      %p177 = por %p175, %p176
      %p178 = scmp.ne.s32.totalorder %s164, %s165
      %p179 = scmp.eq.s32.totalorder %s21, 1
      %p180 = por %p178, %p179
      %p182 = scmp.ne.s32.totalorder %s165, %s181
      %p183 = scmp.eq.s32.totalorder %s21, 0
      %p184 = por %p182, %p183
      %p185 = scmp.le.s32.totalorder 1, %s15
      %p186 = scmp.lt.s32.totalorder %s15, 3
      %p187 = pnand %p185, %p186
      %p188 = pneg %p187
      // Predicated region
      $region9: #{tpu_custom_call.1} parent=5 // pred_check
        _
      $region10: #{tpu_custom_call.1} parent=5 // pred_check_branch
        %190 = sbr.rel (%p187) target = $region12
      $region11: #{tpu_custom_call.1} parent=5 // pred_region
        %s191 = ssub.s32 %s15, 1
        // Predicated region
        $region13: #{tpu_custom_call.1} parent=11 // pred_check
          %p192 = pneg %p88
        $region14: #{tpu_custom_call.1} parent=11 // pred_check_branch
          %194 = sbr.rel (%p192) target = $region16
        $region15: #{tpu_custom_call.1} parent=11 // pred_region
          _
        $region16: #{tpu_custom_call.1} parent=11 // pred_fallthru
          _
        // Predicated region
        $region17: #{tpu_custom_call.1} parent=11 // pred_check
          %p195 = pneg %p109
        $region18: #{tpu_custom_call.1} parent=11 // pred_check_branch
          %197 = sbr.rel (%p195) target = $region20
        $region19: #{tpu_custom_call.1} parent=11 // pred_region
          _
        $region20: #{tpu_custom_call.1} parent=11 // pred_fallthru
          _
        // Predicated region
        $region21: #{tpu_custom_call.1} parent=11 // pred_check
          %p198 = pneg %p130
        $region22: #{tpu_custom_call.1} parent=11 // pred_check_branch
          %200 = sbr.rel (%p198) target = $region24
        $region23: #{tpu_custom_call.1} parent=11 // pred_region
          _
        $region24: #{tpu_custom_call.1} parent=11 // pred_fallthru
          _
        // Predicated region
        $region25: #{tpu_custom_call.1} parent=11 // pred_check
          %p201 = pneg %p151
        $region26: #{tpu_custom_call.1} parent=11 // pred_check_branch
          %203 = sbr.rel (%p201) target = $region28
        $region27: #{tpu_custom_call.1} parent=11 // pred_region
          _
        $region28: #{tpu_custom_call.1} parent=11 // pred_fallthru
          _
      $region12: #{tpu_custom_call.1} parent=5 // pred_fallthru
        _
      %p204 = scmp.lt.s32.totalorder %s15, 2
      // Predicated region
      $region29: #{tpu_custom_call.1} parent=5 // pred_check
        %p205 = pneg %p204
      $region30: #{tpu_custom_call.1} parent=5 // pred_check_branch
        %207 = sbr.rel (%p205) target = $region32
      $region31: #{tpu_custom_call.1} parent=5 // pred_region
        // Predicated region
        $region33: #{tpu_custom_call.1} parent=31 // pred_check
          %p208 = pneg %p35
        $region34: #{tpu_custom_call.1} parent=31 // pred_check_branch
          %210 = sbr.rel (%p208) target = $region36
        $region35: #{tpu_custom_call.1} parent=31 // pred_region
          %s211 = smul.u32 20, %s15
          %s212 = ssub.s32 38, %s211
          %p213 = scmp.lt.s32.totalorder %s212, 20
          %s214 = scalar_select %p213, %s212, 20
          %s215 = smul.u32 128, %s214
          %p216 = scmp.lt.s32.totalorder %s211, 37
          %s217 = scalar_select %p216, %s211, 37
          %s218 = smul.addr %s217, 8
          %s219 = scalar_lea.vmem %s0, %s218
          %s220 = smul.u32 20, %s15
          %s221 = ssub.s32 38, %s220
          %p222 = scmp.lt.s32.totalorder %s221, 20
          %s223 = scalar_select %p222, %s221, 20
          %s224 = smul.u32 128, %s223
        $region36: #{tpu_custom_call.1} parent=31 // pred_fallthru
          _
        // Predicated region
        $region37: #{tpu_custom_call.1} parent=31 // pred_check
          %p225 = pneg %p61
        $region38: #{tpu_custom_call.1} parent=31 // pred_check_branch
          %227 = sbr.rel (%p225) target = $region40
        $region39: #{tpu_custom_call.1} parent=31 // pred_region
          %s228 = smul.u32 20, %s15
          %s229 = ssub.s32 38, %s228
          %p230 = scmp.lt.s32.totalorder %s229, 20
          %s231 = scalar_select %p230, %s229, 20
          %s232 = smul.u32 128, %s231
          %p233 = scmp.lt.s32.totalorder %s228, 37
          %s234 = scalar_select %p233, %s228, 37
          %s235 = smul.addr %s234, 8
          %s236 = scalar_lea.vmem %s1, %s235
          %s237 = smul.u32 20, %s15
          %s238 = ssub.s32 38, %s237
          %p239 = scmp.lt.s32.totalorder %s238, 20
          %s240 = scalar_select %p239, %s238, 20
          %s241 = smul.u32 128, %s240
        $region40: #{tpu_custom_call.1} parent=31 // pred_fallthru
          _
      $region32: #{tpu_custom_call.1} parent=5 // pred_fallthru
        _
      %p242 = scmp.le.s32.totalorder 1, %s15
      %p243 = scmp.lt.s32.totalorder %s15, 3
      %p244 = pnand %p242, %p243
      %p245 = pneg %p244
      // Predicated region
      $region41: #{tpu_custom_call.1} parent=5 // pred_check
        _
      $region42: #{tpu_custom_call.1} parent=5 // pred_check_branch
        %247 = sbr.rel (%p244) target = $region44
      $region43: #{tpu_custom_call.1} parent=5 // pred_region
        %s248 = ssub.s32 %s15, 1
        %s249 = smul.u32 20, %s20
        %s250 = ssub.s32 38, %s249
        %p251 = scmp.lt.s32.totalorder %s250, 20
        %s252 = scalar_select %p251, %s250, 20
        %s253 = smul.u32 128, %s252
        %p254 = scmp.lt.s32.totalorder %s249, 37
        %s255 = scalar_select %p254, %s249, 37
        %s256 = smul.addr %s255, 8
        %s257 = scalar_lea.vmem %s0, %s256
        %p258 = pneg %p41
        %p259 = pneg %p38
        %s260 = smul.u32 20, %s20
        %s261 = ssub.s32 38, %s260
        %p262 = scmp.lt.s32.totalorder %s261, 20
        %s263 = scalar_select %p262, %s261, 20
        %s264 = smul.u32 128, %s263
        %p265 = scmp.lt.s32.totalorder %s260, 37
        %s266 = scalar_select %p265, %s260, 37
        %s267 = smul.addr %s266, 8
        %s268 = scalar_lea.vmem %s1, %s267
        %p269 = pneg %p67
        %p270 = pneg %p64
        %p271 = pneg %p88
        %p272 = pneg %p85
        %p273 = pneg %p109
        %p274 = pneg %p106
        %p275 = pneg %p130
        %p276 = pneg %p127
        %p277 = pneg %p151
        %p278 = pneg %p148
        %p279 = pneg %p177
        %p280 = pneg %p174
        %s281 = sand.u32 %s164, 1
        %s282 = scalar_lea.sflag [#allocation3], %s281
        %s283 = sand.u32 %s164, 1
        %s284 = smul.addr %s283, 160
        %s285 = scalar_lea.vmem [#allocation2], %s284
        %s286 = smul.u32 20, %s20
        %s287 = ssub.s32 38, %s286
        %p288 = scmp.lt.s32.totalorder %s287, 20
        %s289 = scalar_select %p288, %s287, 20
        %s290 = smul.u32 128, %s289
        %p291 = scmp.lt.s32.totalorder %s286, 37
        %s292 = scalar_select %p291, %s286, 37
        %s293 = smul.addr %s292, 8
        %s294 = scalar_lea.vmem %s0, %s293
        %s295 = smul.u32 20, %s20
        %s296 = ssub.s32 38, %s295
        %p297 = scmp.lt.s32.totalorder %s296, 20
        %s298 = scalar_select %p297, %s296, 20
        %s299 = smul.u32 128, %s298
        %s300 = smul.u32 20, %s20
        %s301 = ssub.s32 38, %s300
        %p302 = scmp.lt.s32.totalorder %s301, 20
        %s303 = scalar_select %p302, %s301, 20
        %s304 = smul.u32 128, %s303
        %p305 = scmp.lt.s32.totalorder %s300, 37
        %s306 = scalar_select %p305, %s300, 37
        %s307 = smul.addr %s306, 8
        %s308 = scalar_lea.vmem %s1, %s307
        %s309 = smul.u32 20, %s20
        %s310 = ssub.s32 38, %s309
        %p311 = scmp.lt.s32.totalorder %s310, 20
        %s312 = scalar_select %p311, %s310, 20
        %s313 = smul.u32 128, %s312
        %s314 = smul.u32 20, %s20
        %s315 = ssub.s32 38, %s314
        %p316 = scmp.lt.s32.totalorder %s315, 20
        %s317 = scalar_select %p316, %s315, 20
        %s318 = smul.u32 128, %s317
        %v319 = vld [vmem:[%s294] sm:$0xff]
        %v320 = vld [vmem:[%s294 + $0x8] sm:$0xff]
        %v321 = vld [vmem:[%s294 + $0x10] sm:$0xff]
        %v322 = vld [vmem:[%s294 + $0x18] sm:$0xff]
        %v323 = vld [vmem:[%s294 + $0x20] sm:$0xff]
        %v324 = vld [vmem:[%s294 + $0x28] sm:$0xff]
        %v325 = vld [vmem:[%s294 + $0x30] sm:$0xff]
        %v326 = vld [vmem:[%s294 + $0x38] sm:$0xff]
        %v327 = vld [vmem:[%s294 + $0x40] sm:$0xff]
        %v328 = vld [vmem:[%s294 + $0x48] sm:$0xff]
        %v329 = vld [vmem:[%s294 + $0x50] sm:$0xff]
        %v330 = vld [vmem:[%s294 + $0x58] sm:$0xff]
        %v331 = vld [vmem:[%s294 + $0x60] sm:$0xff]
        %v332 = vld [vmem:[%s294 + $0x68] sm:$0xff]
        %v333 = vld [vmem:[%s294 + $0x70] sm:$0xff]
        %v334 = vld [vmem:[%s294 + $0x78] sm:$0xff]
        %v335 = vld [vmem:[%s294 + $0x80] sm:$0xff]
        %v336 = vld [vmem:[%s294 + $0x88] sm:$0xff]
        %v337 = vld [vmem:[%s294 + $0x90] sm:$0xff]
        %v338 = vld [vmem:[%s294 + $0x98] sm:$0xff]
        %v339 = vld [vmem:[%s308] sm:$0xff]
        %v340 = vld [vmem:[%s308 + $0x8] sm:$0xff]
        %v341 = vld [vmem:[%s308 + $0x10] sm:$0xff]
        %v342 = vld [vmem:[%s308 + $0x18] sm:$0xff]
        %v343 = vld [vmem:[%s308 + $0x20] sm:$0xff]
        %v344 = vld [vmem:[%s308 + $0x28] sm:$0xff]
        %v345 = vld [vmem:[%s308 + $0x30] sm:$0xff]
        %v346 = vld [vmem:[%s308 + $0x38] sm:$0xff]
        %v347 = vld [vmem:[%s308 + $0x40] sm:$0xff]
        %v348 = vld [vmem:[%s308 + $0x48] sm:$0xff]
        %v349 = vld [vmem:[%s308 + $0x50] sm:$0xff]
        %v350 = vld [vmem:[%s308 + $0x58] sm:$0xff]
        %v351 = vld [vmem:[%s308 + $0x60] sm:$0xff]
        %v352 = vld [vmem:[%s308 + $0x68] sm:$0xff]
        %v353 = vld [vmem:[%s308 + $0x70] sm:$0xff]
        %v354 = vld [vmem:[%s308 + $0x78] sm:$0xff]
        %v355 = vld [vmem:[%s308 + $0x80] sm:$0xff]
        %v356 = vld [vmem:[%s308 + $0x88] sm:$0xff]
        %v357 = vld [vmem:[%s308 + $0x90] sm:$0xff]
        %v358 = vld [vmem:[%s308 + $0x98] sm:$0xff]
        %v359 = vld [vmem:[%s3] sm:$0xff]
        %v360 = vld [vmem:[%s3 + $0x8] sm:$0xff]
        %v361 = vld [vmem:[%s3 + $0x10] sm:$0xff]
        %v362 = vld [vmem:[%s3 + $0x18] sm:$0xff]
        %v363 = vld [vmem:[%s3 + $0x20] sm:$0xff]
        %v364 = vld [vmem:[%s3 + $0x28] sm:$0xff]
        %v365 = vld [vmem:[%s3 + $0x30] sm:$0xff]
        %v366 = vld [vmem:[%s3 + $0x38] sm:$0xff]
        %v367 = vld [vmem:[%s3 + $0x40] sm:$0xff]
        %v368 = vld [vmem:[%s3 + $0x48] sm:$0xff]
        %v369 = vld [vmem:[%s3 + $0x50] sm:$0xff]
        %v370 = vld [vmem:[%s3 + $0x58] sm:$0xff]
        %v371 = vld [vmem:[%s3 + $0x60] sm:$0xff]
        %v372 = vld [vmem:[%s3 + $0x68] sm:$0xff]
        %v373 = vld [vmem:[%s3 + $0x70] sm:$0xff]
        %v374 = vld [vmem:[%s3 + $0x78] sm:$0xff]
        %vm375 = vcmask 523264
        %v377 = vsel %vm375, %v339, 0
        %v380 = vsel %vm375, %v340, 0
        %v383 = vsel %vm375, %v341, 0
        %v386 = vsel %vm375, %v342, 0
        %v389 = vsel %vm375, %v343, 0
        %v392 = vsel %vm375, %v344, 0
        %v395 = vsel %vm375, %v345, 0
        %v398 = vsel %vm375, %v346, 0
        %v401 = vsel %vm375, %v347, 0
        %v404 = vsel %vm375, %v348, 0
        %v407 = vsel %vm375, %v349, 0
        %v410 = vsel %vm375, %v350, 0
        %v413 = vsel %vm375, %v351, 0
        %v416 = vsel %vm375, %v352, 0
        %v419 = vsel %vm375, %v353, 0
        %v422 = vsel %vm375, %v354, 0
        %v425 = vsel %vm375, %v355, 0
        %v428 = vsel %vm375, %v356, 0
        %v431 = vsel %vm375, %v357, 0
        %v434 = vsel %vm375, %v358, 0
        %436 = vmatprep.subr.mxu0 %v360
        %437 = vmatpush1.msra.mxu0 %v359
        %438 = vmatprep.subr.mxu0 %v362
        %439 = vmatpush1.msra.mxu0 %v361
        %440 = vmatprep.subr.mxu0 %v364
        %441 = vmatpush1.msra.mxu0 %v363
        %442 = vmatprep.subr.mxu0 %v366
        %443 = vmatpush1.msra.mxu0 %v365
        %444 = vmatprep.subr.mxu0 %v368
        %445 = vmatpush1.msra.mxu0 %v367
        %446 = vmatprep.subr.mxu0 %v370
        %447 = vmatpush1.msra.mxu0 %v369
        %448 = vmatprep.subr.mxu0 %v372
        %449 = vmatpush1.msra.mxu0 %v371
        %450 = vmatprep.subr.mxu0 %v374
        %451 = vmatpush1.msra.mxu0 %v373
        %452 = vmatprep.subr.mxu0 0.0
        %453 = vmatpush1.msra.mxu0 0.0
        %454 = vmatprep.subr.mxu0 0.0
        %455 = vmatpush1.msra.mxu0 0.0
        %456 = vmatprep.subr.mxu0 0.0
        %457 = vmatpush1.msra.mxu0 0.0
        %458 = vmatprep.subr.mxu0 0.0
        %459 = vmatpush1.msra.mxu0 0.0
        %460 = vmatprep.subr.mxu0 0.0
        %461 = vmatpush1.msra.mxu0 0.0
        %462 = vmatprep.subr.mxu0 0.0
        %463 = vmatpush1.msra.mxu0 0.0
        %464 = vmatprep.subr.mxu0 0.0
        %465 = vmatpush1.msra.mxu0 0.0
        %466 = vmatprep.subr.mxu0 0.0
        %467 = vmatpush1.msra.mxu0 0.0
        %468 = vmatprep.subr.mxu0 0.0
        %469 = vmatpush1.msra.mxu0 0.0
        %470 = vmatprep.subr.mxu0 0.0
        %471 = vmatpush1.msra.mxu0 0.0
        %472 = vmatprep.subr.mxu0 0.0
        %473 = vmatpush1.msra.mxu0 0.0
        %474 = vmatprep.subr.mxu0 0.0
        %475 = vmatpush1.msra.mxu0 0.0
        %476 = vmatprep.subr.mxu0 0.0
        %477 = vmatpush1.msra.mxu0 0.0
        %478 = vmatprep.subr.mxu0 0.0
        %479 = vmatpush1.msra.mxu0 0.0
        %480 = vmatprep.subr.mxu0 0.0
        %481 = vmatpush1.msra.mxu0 0.0
        %482 = vmatprep.subr.mxu0 0.0
        %483 = vmatpush1.msra.mxu0 0.0
        %484 = vmatprep.subr.mxu0 0.0
        %485 = vmatpush1.msra.mxu0 0.0
        %486 = vmatprep.subr.mxu0 0.0
        %487 = vmatpush1.msra.mxu0 0.0
        %488 = vmatprep.subr.mxu0 0.0
        %489 = vmatpush1.msra.mxu0 0.0
        %490 = vmatprep.subr.mxu0 0.0
        %491 = vmatpush1.msra.mxu0 0.0
        %492 = vmatprep.subr.mxu0 0.0
        %493 = vmatpush1.msra.mxu0 0.0
        %494 = vmatprep.subr.mxu0 0.0
        %495 = vmatpush1.msra.mxu0 0.0
        %496 = vmatprep.subr.mxu0 0.0
        %497 = vmatpush1.msra.mxu0 0.0
        %498 = vmatprep.subr.mxu0 0.0
        %499 = vmatpush1.msra.mxu0 0.0
        %500 = vmatprep.mubr.f32.mxu0 0.0
        %501 = vmatmul.mubr.f32.gmra.mrb[0].mxu0 %v377
        %v502 = vpop.f32.mrb[0].mxu0
        %v503 = vadd.f32 0.0, %v502
        %v504 = vpop.f32.mrb[0].mxu0
        %v505 = vadd.f32 0.0, %v504
        %506 = vmatprep.mubr.f32.mxu0 0.0
        %507 = vmatmul.mubr.f32.gmra.mrb[0].mxu0 %v380
        %v508 = vpop.f32.mrb[0].mxu0
        %v509 = vadd.f32 0.0, %v508
        %v510 = vpop.f32.mrb[0].mxu0
        %v511 = vadd.f32 0.0, %v510
        %512 = vmatprep.mubr.f32.mxu0 0.0
        %513 = vmatmul.mubr.f32.gmra.mrb[0].mxu0 %v383
        %v514 = vpop.f32.mrb[0].mxu0
        %v515 = vadd.f32 0.0, %v514
        %v516 = vpop.f32.mrb[0].mxu0
        %v517 = vadd.f32 0.0, %v516
        %518 = vmatprep.mubr.f32.mxu0 0.0
        %519 = vmatmul.mubr.f32.gmra.mrb[0].mxu0 %v386
        %v520 = vpop.f32.mrb[0].mxu0
        %v521 = vadd.f32 0.0, %v520
        %v522 = vpop.f32.mrb[0].mxu0
        %v523 = vadd.f32 0.0, %v522
        %524 = vmatprep.mubr.f32.mxu0 0.0
        %525 = vmatmul.mubr.f32.gmra.mrb[0].mxu0 %v389
        %v526 = vpop.f32.mrb[0].mxu0
        %v527 = vadd.f32 0.0, %v526
        %v528 = vpop.f32.mrb[0].mxu0
        %v529 = vadd.f32 0.0, %v528
        %530 = vmatprep.mubr.f32.mxu0 0.0
        %531 = vmatmul.mubr.f32.gmra.mrb[0].mxu0 %v392
        %v532 = vpop.f32.mrb[0].mxu0
        %v533 = vadd.f32 0.0, %v532
        %v534 = vpop.f32.mrb[0].mxu0
        %v535 = vadd.f32 0.0, %v534
        %536 = vmatprep.mubr.f32.mxu0 0.0
        %537 = vmatmul.mubr.f32.gmra.mrb[0].mxu0 %v395
        %v538 = vpop.f32.mrb[0].mxu0
        %v539 = vadd.f32 0.0, %v538
        %v540 = vpop.f32.mrb[0].mxu0
        %v541 = vadd.f32 0.0, %v540
        %542 = vmatprep.mubr.f32.mxu0 0.0
        %543 = vmatmul.mubr.f32.gmra.mrb[0].mxu0 %v398
        %v544 = vpop.f32.mrb[0].mxu0
        %v545 = vadd.f32 0.0, %v544
        %v546 = vpop.f32.mrb[0].mxu0
        %v547 = vadd.f32 0.0, %v546
        %548 = vmatprep.mubr.f32.mxu0 0.0
        %549 = vmatmul.mubr.f32.gmra.mrb[0].mxu0 %v401
        %v550 = vpop.f32.mrb[0].mxu0
        %v551 = vadd.f32 0.0, %v550
        %v552 = vpop.f32.mrb[0].mxu0
        %v553 = vadd.f32 0.0, %v552
        %554 = vmatprep.mubr.f32.mxu0 0.0
        %555 = vmatmul.mubr.f32.gmra.mrb[0].mxu0 %v404
        %v556 = vpop.f32.mrb[0].mxu0
        %v557 = vadd.f32 0.0, %v556
        %v558 = vpop.f32.mrb[0].mxu0
        %v559 = vadd.f32 0.0, %v558
        %560 = vmatprep.mubr.f32.mxu0 0.0
        %561 = vmatmul.mubr.f32.gmra.mrb[0].mxu0 %v407
        %v562 = vpop.f32.mrb[0].mxu0
        %v563 = vadd.f32 0.0, %v562
        %v564 = vpop.f32.mrb[0].mxu0
        %v565 = vadd.f32 0.0, %v564
        %566 = vmatprep.mubr.f32.mxu0 0.0
        %567 = vmatmul.mubr.f32.gmra.mrb[0].mxu0 %v410
        %v568 = vpop.f32.mrb[0].mxu0
        %v569 = vadd.f32 0.0, %v568
        %v570 = vpop.f32.mrb[0].mxu0
        %v571 = vadd.f32 0.0, %v570
        %572 = vmatprep.mubr.f32.mxu0 0.0
        %573 = vmatmul.mubr.f32.gmra.mrb[0].mxu0 %v413
        %v574 = vpop.f32.mrb[0].mxu0
        %v575 = vadd.f32 0.0, %v574
        %v576 = vpop.f32.mrb[0].mxu0
        %v577 = vadd.f32 0.0, %v576
        %578 = vmatprep.mubr.f32.mxu0 0.0
        %579 = vmatmul.mubr.f32.gmra.mrb[0].mxu0 %v416
        %v580 = vpop.f32.mrb[0].mxu0
        %v581 = vadd.f32 0.0, %v580
        %v582 = vpop.f32.mrb[0].mxu0
        %v583 = vadd.f32 0.0, %v582
        %584 = vmatprep.mubr.f32.mxu0 0.0
        %585 = vmatmul.mubr.f32.gmra.mrb[0].mxu0 %v419
        %v586 = vpop.f32.mrb[0].mxu0
        %v587 = vadd.f32 0.0, %v586
        %v588 = vpop.f32.mrb[0].mxu0
        %v589 = vadd.f32 0.0, %v588
        %590 = vmatprep.mubr.f32.mxu0 0.0
        %591 = vmatmul.mubr.f32.gmra.mrb[0].mxu0 %v422
        %v592 = vpop.f32.mrb[0].mxu0
        %v593 = vadd.f32 0.0, %v592
        %v594 = vpop.f32.mrb[0].mxu0
        %v595 = vadd.f32 0.0, %v594
        %596 = vmatprep.mubr.f32.mxu0 0.0
        %597 = vmatmul.mubr.f32.gmra.mrb[0].mxu0 %v425
        %v598 = vpop.f32.mrb[0].mxu0
        %v599 = vadd.f32 0.0, %v598
        %v600 = vpop.f32.mrb[0].mxu0
        %v601 = vadd.f32 0.0, %v600
        %602 = vmatprep.mubr.f32.mxu0 0.0
        %603 = vmatmul.mubr.f32.gmra.mrb[0].mxu0 %v428
        %v604 = vpop.f32.mrb[0].mxu0
        %v605 = vadd.f32 0.0, %v604
        %v606 = vpop.f32.mrb[0].mxu0
        %v607 = vadd.f32 0.0, %v606
        %608 = vmatprep.mubr.f32.mxu0 0.0
        %609 = vmatmul.mubr.f32.gmra.mrb[0].mxu0 %v431
        %v610 = vpop.f32.mrb[0].mxu0
        %v611 = vadd.f32 0.0, %v610
        %v612 = vpop.f32.mrb[0].mxu0
        %v613 = vadd.f32 0.0, %v612
        %614 = vmatprep.mubr.f32.mxu0 0.0
        %615 = vmatmul.mubr.f32.gmra.mrb[0].mxu0 %v434
        %v616 = vpop.f32.mrb[0].mxu0
        %v617 = vadd.f32 0.0, %v616
        %v618 = vpop.f32.mrb[0].mxu0
        %v619 = vadd.f32 0.0, %v618
        %620 = vdwg.mxu0
        %v621 = vld [vmem:[%s2] sm:$0xff]
        %v622 = vld [vmem:[%s2 + $0x8] sm:$0xff]
        %v623 = vld [vmem:[%s2 + $0x10] sm:$0xff]
        %v624 = vld [vmem:[%s2 + $0x18] sm:$0xff]
        %v625 = vld [vmem:[%s2 + $0x20] sm:$0xff]
        %v626 = vld [vmem:[%s2 + $0x28] sm:$0xff]
        %v627 = vld [vmem:[%s2 + $0x30] sm:$0xff]
        %v628 = vld [vmem:[%s2 + $0x38] sm:$0xff]
        %v630 = vsel %vm375, %v319, 0
        %v633 = vsel %vm375, %v320, 0
        %v636 = vsel %vm375, %v321, 0
        %v639 = vsel %vm375, %v322, 0
        %v642 = vsel %vm375, %v323, 0
        %v645 = vsel %vm375, %v324, 0
        %v648 = vsel %vm375, %v325, 0
        %v651 = vsel %vm375, %v326, 0
        %v654 = vsel %vm375, %v327, 0
        %v657 = vsel %vm375, %v328, 0
        %v660 = vsel %vm375, %v329, 0
        %v663 = vsel %vm375, %v330, 0
        %v666 = vsel %vm375, %v331, 0
        %v669 = vsel %vm375, %v332, 0
        %v672 = vsel %vm375, %v333, 0
        %v675 = vsel %vm375, %v334, 0
        %v678 = vsel %vm375, %v335, 0
        %v681 = vsel %vm375, %v336, 0
        %v684 = vsel %vm375, %v337, 0
        %v687 = vsel %vm375, %v338, 0
        %689 = vmatprep.subr.mxu0 0.0
        %690 = vmatpush1.msra.mxu0 %v621
        %691 = vmatprep.subr.mxu0 0.0
        %692 = vmatpush1.msra.mxu0 %v622
        %693 = vmatprep.subr.mxu0 0.0
        %694 = vmatpush1.msra.mxu0 %v623
        %695 = vmatprep.subr.mxu0 0.0
        %696 = vmatpush1.msra.mxu0 %v624
        %697 = vmatprep.subr.mxu0 0.0
        %698 = vmatpush1.msra.mxu0 %v625
        %699 = vmatprep.subr.mxu0 0.0
        %700 = vmatpush1.msra.mxu0 %v626
        %701 = vmatprep.subr.mxu0 0.0
        %702 = vmatpush1.msra.mxu0 %v627
        %703 = vmatprep.subr.mxu0 0.0
        %704 = vmatpush1.msra.mxu0 %v628
        %705 = vmatprep.subr.mxu0 0.0
        %706 = vmatpush1.msra.mxu0 0.0
        %707 = vmatprep.subr.mxu0 0.0
        %708 = vmatpush1.msra.mxu0 0.0
        %709 = vmatprep.subr.mxu0 0.0
        %710 = vmatpush1.msra.mxu0 0.0
        %711 = vmatprep.subr.mxu0 0.0
        %712 = vmatpush1.msra.mxu0 0.0
        %713 = vmatprep.subr.mxu0 0.0
        %714 = vmatpush1.msra.mxu0 0.0
        %715 = vmatprep.subr.mxu0 0.0
        %716 = vmatpush1.msra.mxu0 0.0
        %717 = vmatprep.subr.mxu0 0.0
        %718 = vmatpush1.msra.mxu0 0.0
        %719 = vmatprep.subr.mxu0 0.0
        %720 = vmatpush1.msra.mxu0 0.0
        %721 = vmatprep.subr.mxu0 0.0
        %722 = vmatpush1.msra.mxu0 0.0
        %723 = vmatprep.subr.mxu0 0.0
        %724 = vmatpush1.msra.mxu0 0.0
        %725 = vmatprep.subr.mxu0 0.0
        %726 = vmatpush1.msra.mxu0 0.0
        %727 = vmatprep.subr.mxu0 0.0
        %728 = vmatpush1.msra.mxu0 0.0
        %729 = vmatprep.subr.mxu0 0.0
        %730 = vmatpush1.msra.mxu0 0.0
        %731 = vmatprep.subr.mxu0 0.0
        %732 = vmatpush1.msra.mxu0 0.0
        %733 = vmatprep.subr.mxu0 0.0
        %734 = vmatpush1.msra.mxu0 0.0
        %735 = vmatprep.subr.mxu0 0.0
        %736 = vmatpush1.msra.mxu0 0.0
        %737 = vmatprep.subr.mxu0 0.0
        %738 = vmatpush1.msra.mxu0 0.0
        %739 = vmatprep.subr.mxu0 0.0
        %740 = vmatpush1.msra.mxu0 0.0
        %741 = vmatprep.subr.mxu0 0.0
        %742 = vmatpush1.msra.mxu0 0.0
        %743 = vmatprep.subr.mxu0 0.0
        %744 = vmatpush1.msra.mxu0 0.0
        %745 = vmatprep.subr.mxu0 0.0
        %746 = vmatpush1.msra.mxu0 0.0
        %747 = vmatprep.subr.mxu0 0.0
        %748 = vmatpush1.msra.mxu0 0.0
        %749 = vmatprep.subr.mxu0 0.0
        %750 = vmatpush1.msra.mxu0 0.0
        %751 = vmatprep.subr.mxu0 0.0
        %752 = vmatpush1.msra.mxu0 0.0
        %753 = vmatprep.mubr.f32.mxu0 0.0
        %754 = vmatmul.mubr.f32.gmra.mrb[0].mxu0 %v630
        %v755 = vpop.f32.mrb[0].mxu0
        %v756 = vadd.f32 %v503, %v755
        %v757 = vpop.f32.mrb[0].mxu0
        %758 = vmatprep.mubr.f32.mxu0 0.0
        %759 = vmatmul.mubr.f32.gmra.mrb[0].mxu0 %v633
        %v760 = vpop.f32.mrb[0].mxu0
        %v761 = vadd.f32 %v509, %v760
        %v762 = vpop.f32.mrb[0].mxu0
        %763 = vmatprep.mubr.f32.mxu0 0.0
        %764 = vmatmul.mubr.f32.gmra.mrb[0].mxu0 %v636
        %v765 = vpop.f32.mrb[0].mxu0
        %v766 = vadd.f32 %v515, %v765
        %v767 = vpop.f32.mrb[0].mxu0
        %768 = vmatprep.mubr.f32.mxu0 0.0
        %769 = vmatmul.mubr.f32.gmra.mrb[0].mxu0 %v639
        %v770 = vpop.f32.mrb[0].mxu0
        %v771 = vadd.f32 %v521, %v770
        %v772 = vpop.f32.mrb[0].mxu0
        %773 = vmatprep.mubr.f32.mxu0 0.0
        %774 = vmatmul.mubr.f32.gmra.mrb[0].mxu0 %v642
        %v775 = vpop.f32.mrb[0].mxu0
        %v776 = vadd.f32 %v527, %v775
        %v777 = vpop.f32.mrb[0].mxu0
        %778 = vmatprep.mubr.f32.mxu0 0.0
        %779 = vmatmul.mubr.f32.gmra.mrb[0].mxu0 %v645
        %v780 = vpop.f32.mrb[0].mxu0
        %v781 = vadd.f32 %v533, %v780
        %v782 = vpop.f32.mrb[0].mxu0
        %783 = vmatprep.mubr.f32.mxu0 0.0
        %784 = vmatmul.mubr.f32.gmra.mrb[0].mxu0 %v648
        %v785 = vpop.f32.mrb[0].mxu0
        %v786 = vadd.f32 %v539, %v785
        %v787 = vpop.f32.mrb[0].mxu0
        %788 = vmatprep.mubr.f32.mxu0 0.0
        %789 = vmatmul.mubr.f32.gmra.mrb[0].mxu0 %v651
        %v790 = vpop.f32.mrb[0].mxu0
        %v791 = vadd.f32 %v545, %v790
        %v792 = vpop.f32.mrb[0].mxu0
        %793 = vmatprep.mubr.f32.mxu0 0.0
        %794 = vmatmul.mubr.f32.gmra.mrb[0].mxu0 %v654
        %v795 = vpop.f32.mrb[0].mxu0
        %v796 = vadd.f32 %v551, %v795
        %v797 = vpop.f32.mrb[0].mxu0
        %798 = vmatprep.mubr.f32.mxu0 0.0
        %799 = vmatmul.mubr.f32.gmra.mrb[0].mxu0 %v657
        %v800 = vpop.f32.mrb[0].mxu0
        %v801 = vadd.f32 %v557, %v800
        %v802 = vpop.f32.mrb[0].mxu0
        %803 = vmatprep.mubr.f32.mxu0 0.0
        %804 = vmatmul.mubr.f32.gmra.mrb[0].mxu0 %v660
        %v805 = vpop.f32.mrb[0].mxu0
        %v806 = vadd.f32 %v563, %v805
        %v807 = vpop.f32.mrb[0].mxu0
        %808 = vmatprep.mubr.f32.mxu0 0.0
        %809 = vmatmul.mubr.f32.gmra.mrb[0].mxu0 %v663
        %v810 = vpop.f32.mrb[0].mxu0
        %v811 = vadd.f32 %v569, %v810
        %v812 = vpop.f32.mrb[0].mxu0
        %813 = vmatprep.mubr.f32.mxu0 0.0
        %814 = vmatmul.mubr.f32.gmra.mrb[0].mxu0 %v666
        %v815 = vpop.f32.mrb[0].mxu0
        %v816 = vadd.f32 %v575, %v815
        %v817 = vpop.f32.mrb[0].mxu0
        %818 = vmatprep.mubr.f32.mxu0 0.0
        %819 = vmatmul.mubr.f32.gmra.mrb[0].mxu0 %v669
        %v820 = vpop.f32.mrb[0].mxu0
        %v821 = vadd.f32 %v581, %v820
        %v822 = vpop.f32.mrb[0].mxu0
        %823 = vmatprep.mubr.f32.mxu0 0.0
        %824 = vmatmul.mubr.f32.gmra.mrb[0].mxu0 %v672
        %v825 = vpop.f32.mrb[0].mxu0
        %v826 = vadd.f32 %v587, %v825
        %v827 = vpop.f32.mrb[0].mxu0
        %828 = vmatprep.mubr.f32.mxu0 0.0
        %829 = vmatmul.mubr.f32.gmra.mrb[0].mxu0 %v675
        %v830 = vpop.f32.mrb[0].mxu0
        %v831 = vadd.f32 %v593, %v830
        %v832 = vpop.f32.mrb[0].mxu0
        %833 = vmatprep.mubr.f32.mxu0 0.0
        %834 = vmatmul.mubr.f32.gmra.mrb[0].mxu0 %v678
        %v835 = vpop.f32.mrb[0].mxu0
        %v836 = vadd.f32 %v599, %v835
        %v837 = vpop.f32.mrb[0].mxu0
        %838 = vmatprep.mubr.f32.mxu0 0.0
        %839 = vmatmul.mubr.f32.gmra.mrb[0].mxu0 %v681
        %v840 = vpop.f32.mrb[0].mxu0
        %v841 = vadd.f32 %v605, %v840
        %v842 = vpop.f32.mrb[0].mxu0
        %843 = vmatprep.mubr.f32.mxu0 0.0
        %844 = vmatmul.mubr.f32.gmra.mrb[0].mxu0 %v684
        %v845 = vpop.f32.mrb[0].mxu0
        %v846 = vadd.f32 %v611, %v845
        %v847 = vpop.f32.mrb[0].mxu0
        %848 = vmatprep.mubr.f32.mxu0 0.0
        %849 = vmatmul.mubr.f32.gmra.mrb[0].mxu0 %v687
        %v850 = vpop.f32.mrb[0].mxu0
        %v851 = vadd.f32 %v617, %v850
        %v852 = vpop.f32.mrb[0].mxu0
        %853 = vdwg.mxu0
        %v854 = vld [vmem:[%s4] sm:$0x1]
        %v856 = vlaneseq
        %v857 = vshrl.u32 %v856, 7
        %v858 = vsub.s32 0, %v857
        %v859 = vrot.slane %v854, %v858
        %v861 = vadd.f32 %v756, %v859
        %v862 = vadd.f32 %v761, %v859
        %v863 = vadd.f32 %v766, %v859
        %v864 = vadd.f32 %v771, %v859
        %v865 = vadd.f32 %v776, %v859
        %v866 = vadd.f32 %v781, %v859
        %v867 = vadd.f32 %v786, %v859
        %v868 = vadd.f32 %v791, %v859
        %v869 = vadd.f32 %v796, %v859
        %v870 = vadd.f32 %v801, %v859
        %v871 = vadd.f32 %v806, %v859
        %v872 = vadd.f32 %v811, %v859
        %v873 = vadd.f32 %v816, %v859
        %v874 = vadd.f32 %v821, %v859
        %v875 = vadd.f32 %v826, %v859
        %v876 = vadd.f32 %v831, %v859
        %v877 = vadd.f32 %v836, %v859
        %v878 = vadd.f32 %v841, %v859
        %v879 = vadd.f32 %v846, %v859
        %v880 = vadd.f32 %v851, %v859
        %881 = vmax.xlane.f32.xlu0 %v861
        %v882 = vpop.xlane.xlu0 %881
        %883 = vmax.xlane.f32.xlu0 %v862
        %v884 = vpop.xlane.xlu0 %883
        %885 = vmax.xlane.f32.xlu0 %v863
        %v886 = vpop.xlane.xlu0 %885
        %887 = vmax.xlane.f32.xlu0 %v864
        %v888 = vpop.xlane.xlu0 %887
        %889 = vmax.xlane.f32.xlu0 %v865
        %v890 = vpop.xlane.xlu0 %889
        %891 = vmax.xlane.f32.xlu0 %v866
        %v892 = vpop.xlane.xlu0 %891
        %893 = vmax.xlane.f32.xlu0 %v867
        %v894 = vpop.xlane.xlu0 %893
        %895 = vmax.xlane.f32.xlu0 %v868
        %v896 = vpop.xlane.xlu0 %895
        %897 = vmax.xlane.f32.xlu0 %v869
        %v898 = vpop.xlane.xlu0 %897
        %899 = vmax.xlane.f32.xlu0 %v870
        %v900 = vpop.xlane.xlu0 %899
        %901 = vmax.xlane.f32.xlu0 %v871
        %v902 = vpop.xlane.xlu0 %901
        %903 = vmax.xlane.f32.xlu0 %v872
        %v904 = vpop.xlane.xlu0 %903
        %905 = vmax.xlane.f32.xlu0 %v873
        %v906 = vpop.xlane.xlu0 %905
        %907 = vmax.xlane.f32.xlu0 %v874
        %v908 = vpop.xlane.xlu0 %907
        %909 = vmax.xlane.f32.xlu0 %v875
        %v910 = vpop.xlane.xlu0 %909
        %911 = vmax.xlane.f32.xlu0 %v876
        %v912 = vpop.xlane.xlu0 %911
        %913 = vmax.xlane.f32.xlu0 %v877
        %v914 = vpop.xlane.xlu0 %913
        %915 = vmax.xlane.f32.xlu0 %v878
        %v916 = vpop.xlane.xlu0 %915
        %917 = vmax.xlane.f32.xlu0 %v879
        %v918 = vpop.xlane.xlu0 %917
        %919 = vmax.xlane.f32.xlu0 %v880
        %v920 = vpop.xlane.xlu0 %919
        %v921 = vsub.f32 %v861, %v882
        %v922 = vsub.f32 %v862, %v884
        %v923 = vsub.f32 %v863, %v886
        %v924 = vsub.f32 %v864, %v888
        %v925 = vsub.f32 %v865, %v890
        %v926 = vsub.f32 %v866, %v892
        %v927 = vsub.f32 %v867, %v894
        %v928 = vsub.f32 %v868, %v896
        %v929 = vsub.f32 %v869, %v898
        %v930 = vsub.f32 %v870, %v900
        %v931 = vsub.f32 %v871, %v902
        %v932 = vsub.f32 %v872, %v904
        %v933 = vsub.f32 %v873, %v906
        %v934 = vsub.f32 %v874, %v908
        %v935 = vsub.f32 %v875, %v910
        %v936 = vsub.f32 %v876, %v912
        %v937 = vsub.f32 %v877, %v914
        %v938 = vsub.f32 %v878, %v916
        %v939 = vsub.f32 %v879, %v918
        %v940 = vsub.f32 %v880, %v920
        %v941 = vmul.f32 %v921, 1.442695
        %v942 = vpow.pop %v941
        %v943 = vmul.f32 %v922, 1.442695
        %v944 = vpow.pop %v943
        %v945 = vmul.f32 %v923, 1.442695
        %v946 = vpow.pop %v945
        %v947 = vmul.f32 %v924, 1.442695
        %v948 = vpow.pop %v947
        %v949 = vmul.f32 %v925, 1.442695
        %v950 = vpow.pop %v949
        %v951 = vmul.f32 %v926, 1.442695
        %v952 = vpow.pop %v951
        %v953 = vmul.f32 %v927, 1.442695
        %v954 = vpow.pop %v953
        %v955 = vmul.f32 %v928, 1.442695
        %v956 = vpow.pop %v955
        %v957 = vmul.f32 %v929, 1.442695
        %v958 = vpow.pop %v957
        %v959 = vmul.f32 %v930, 1.442695
        %v960 = vpow.pop %v959
        %v961 = vmul.f32 %v931, 1.442695
        %v962 = vpow.pop %v961
        %v963 = vmul.f32 %v932, 1.442695
        %v964 = vpow.pop %v963
        %v965 = vmul.f32 %v933, 1.442695
        %v966 = vpow.pop %v965
        %v967 = vmul.f32 %v934, 1.442695
        %v968 = vpow.pop %v967
        %v969 = vmul.f32 %v935, 1.442695
        %v970 = vpow.pop %v969
        %v971 = vmul.f32 %v936, 1.442695
        %v972 = vpow.pop %v971
        %v973 = vmul.f32 %v937, 1.442695
        %v974 = vpow.pop %v973
        %v975 = vmul.f32 %v938, 1.442695
        %v976 = vpow.pop %v975
        %v977 = vmul.f32 %v939, 1.442695
        %v978 = vpow.pop %v977
        %v979 = vmul.f32 %v940, 1.442695
        %v980 = vpow.pop %v979
        %981 = vadd.xlane.f32.xlu0 %v942
        %v982 = vpop.xlane.xlu0 %981
        %983 = vadd.xlane.f32.xlu0 %v944
        %v984 = vpop.xlane.xlu0 %983
        %985 = vadd.xlane.f32.xlu0 %v946
        %v986 = vpop.xlane.xlu0 %985
        %987 = vadd.xlane.f32.xlu0 %v948
        %v988 = vpop.xlane.xlu0 %987
        %989 = vadd.xlane.f32.xlu0 %v950
        %v990 = vpop.xlane.xlu0 %989
        %991 = vadd.xlane.f32.xlu0 %v952
        %v992 = vpop.xlane.xlu0 %991
        %993 = vadd.xlane.f32.xlu0 %v954
        %v994 = vpop.xlane.xlu0 %993
        %995 = vadd.xlane.f32.xlu0 %v956
        %v996 = vpop.xlane.xlu0 %995
        %997 = vadd.xlane.f32.xlu0 %v958
        %v998 = vpop.xlane.xlu0 %997
        %999 = vadd.xlane.f32.xlu0 %v960
        %v1000 = vpop.xlane.xlu0 %999
        %1001 = vadd.xlane.f32.xlu0 %v962
        %v1002 = vpop.xlane.xlu0 %1001
        %1003 = vadd.xlane.f32.xlu0 %v964
        %v1004 = vpop.xlane.xlu0 %1003
        %1005 = vadd.xlane.f32.xlu0 %v966
        %v1006 = vpop.xlane.xlu0 %1005
        %1007 = vadd.xlane.f32.xlu0 %v968
        %v1008 = vpop.xlane.xlu0 %1007
        %1009 = vadd.xlane.f32.xlu0 %v970
        %v1010 = vpop.xlane.xlu0 %1009
        %1011 = vadd.xlane.f32.xlu0 %v972
        %v1012 = vpop.xlane.xlu0 %1011
        %1013 = vadd.xlane.f32.xlu0 %v974
        %v1014 = vpop.xlane.xlu0 %1013
        %1015 = vadd.xlane.f32.xlu0 %v976
        %v1016 = vpop.xlane.xlu0 %1015
        %1017 = vadd.xlane.f32.xlu0 %v978
        %v1018 = vpop.xlane.xlu0 %1017
        %1019 = vadd.xlane.f32.xlu0 %v980
        %v1020 = vpop.xlane.xlu0 %1019
        %v1021 = vrcp.pop %v982
        %v1022 = vrcp.pop %v984
        %v1023 = vrcp.pop %v986
        %v1024 = vrcp.pop %v988
        %v1025 = vrcp.pop %v990
        %v1026 = vrcp.pop %v992
        %v1027 = vrcp.pop %v994
        %v1028 = vrcp.pop %v996
        %v1029 = vrcp.pop %v998
        %v1030 = vrcp.pop %v1000
        %v1031 = vrcp.pop %v1002
        %v1032 = vrcp.pop %v1004
        %v1033 = vrcp.pop %v1006
        %v1034 = vrcp.pop %v1008
        %v1035 = vrcp.pop %v1010
        %v1036 = vrcp.pop %v1012
        %v1037 = vrcp.pop %v1014
        %v1038 = vrcp.pop %v1016
        %v1039 = vrcp.pop %v1018
        %v1040 = vrcp.pop %v1020
        %v1041 = vmul.f32 %v942, %v1021
        %v1042 = vmul.f32 %v944, %v1022
        %v1043 = vmul.f32 %v946, %v1023
        %v1044 = vmul.f32 %v948, %v1024
        %v1045 = vmul.f32 %v950, %v1025
        %v1046 = vmul.f32 %v952, %v1026
        %v1047 = vmul.f32 %v954, %v1027
        %v1048 = vmul.f32 %v956, %v1028
        %v1049 = vmul.f32 %v958, %v1029
        %v1050 = vmul.f32 %v960, %v1030
        %v1051 = vmul.f32 %v962, %v1031
        %v1052 = vmul.f32 %v964, %v1032
        %v1053 = vmul.f32 %v966, %v1033
        %v1054 = vmul.f32 %v968, %v1034
        %v1055 = vmul.f32 %v970, %v1035
        %v1056 = vmul.f32 %v972, %v1036
        %v1057 = vmul.f32 %v974, %v1037
        %v1058 = vmul.f32 %v976, %v1038
        %v1059 = vmul.f32 %v978, %v1039
        %v1060 = vmul.f32 %v980, %v1040
        %v1061 = vld [vmem:[%s5] sm:$0x1]
        %v1063 = vlaneseq
        %v1064 = vshrl.u32 %v1063, 7
        %v1065 = vsub.s32 0, %v1064
        %v1066 = vrot.slane %v1061, %v1065
        %v1068 = vadd.f32 %v505, %v1066
        %v1069 = vadd.f32 %v511, %v1066
        %v1070 = vadd.f32 %v517, %v1066
        %v1071 = vadd.f32 %v523, %v1066
        %v1072 = vadd.f32 %v529, %v1066
        %v1073 = vadd.f32 %v535, %v1066
        %v1074 = vadd.f32 %v541, %v1066
        %v1075 = vadd.f32 %v547, %v1066
        %v1076 = vadd.f32 %v553, %v1066
        %v1077 = vadd.f32 %v559, %v1066
        %v1078 = vadd.f32 %v565, %v1066
        %v1079 = vadd.f32 %v571, %v1066
        %v1080 = vadd.f32 %v577, %v1066
        %v1081 = vadd.f32 %v583, %v1066
        %v1082 = vadd.f32 %v589, %v1066
        %v1083 = vadd.f32 %v595, %v1066
        %v1084 = vadd.f32 %v601, %v1066
        %v1085 = vadd.f32 %v607, %v1066
        %v1086 = vadd.f32 %v613, %v1066
        %v1087 = vadd.f32 %v619, %v1066
        %v1088 = vmul.f32 %v1041, %v1068
        %v1089 = vmul.f32 %v1042, %v1069
        %v1090 = vmul.f32 %v1043, %v1070
        %v1091 = vmul.f32 %v1044, %v1071
        %v1092 = vmul.f32 %v1045, %v1072
        %v1093 = vmul.f32 %v1046, %v1073
        %v1094 = vmul.f32 %v1047, %v1074
        %v1095 = vmul.f32 %v1048, %v1075
        %v1096 = vmul.f32 %v1049, %v1076
        %v1097 = vmul.f32 %v1050, %v1077
        %v1098 = vmul.f32 %v1051, %v1078
        %v1099 = vmul.f32 %v1052, %v1079
        %v1100 = vmul.f32 %v1053, %v1080
        %v1101 = vmul.f32 %v1054, %v1081
        %v1102 = vmul.f32 %v1055, %v1082
        %v1103 = vmul.f32 %v1056, %v1083
        %v1104 = vmul.f32 %v1057, %v1084
        %v1105 = vmul.f32 %v1058, %v1085
        %v1106 = vmul.f32 %v1059, %v1086
        %v1107 = vmul.f32 %v1060, %v1087
        %1108 = vst [vmem:[%s285] sm:$0xff] %v1088
        %1109 = vst [vmem:[%s285 + $0x8] sm:$0xff] %v1089
        %1110 = vst [vmem:[%s285 + $0x10] sm:$0xff] %v1090
        %1111 = vst [vmem:[%s285 + $0x18] sm:$0xff] %v1091
        %1112 = vst [vmem:[%s285 + $0x20] sm:$0xff] %v1092
        %1113 = vst [vmem:[%s285 + $0x28] sm:$0xff] %v1093
        %1114 = vst [vmem:[%s285 + $0x30] sm:$0xff] %v1094
        %1115 = vst [vmem:[%s285 + $0x38] sm:$0xff] %v1095
        %1116 = vst [vmem:[%s285 + $0x40] sm:$0xff] %v1096
        %1117 = vst [vmem:[%s285 + $0x48] sm:$0xff] %v1097
        %1118 = vst [vmem:[%s285 + $0x50] sm:$0xff] %v1098
        %1119 = vst [vmem:[%s285 + $0x58] sm:$0xff] %v1099
        %1120 = vst [vmem:[%s285 + $0x60] sm:$0xff] %v1100
        %1121 = vst [vmem:[%s285 + $0x68] sm:$0xff] %v1101
        %1122 = vst [vmem:[%s285 + $0x70] sm:$0xff] %v1102
        %1123 = vst [vmem:[%s285 + $0x78] sm:$0xff] %v1103
        %1124 = vst [vmem:[%s285 + $0x80] sm:$0xff] %v1104
        %1125 = vst [vmem:[%s285 + $0x88] sm:$0xff] %v1105
        %1126 = vst [vmem:[%s285 + $0x90] sm:$0xff] %v1106
        %1127 = vst [vmem:[%s285 + $0x98] sm:$0xff] %v1107
        %s1128 = sand.u32 %s164, 1
        %s1129 = scalar_lea.sflag [#allocation3], %s1128
        %s1130 = sand.u32 %s164, 1
        %s1131 = smul.addr %s1130, 160
        %s1132 = scalar_lea.vmem [#allocation2], %s1131
        // Predicated region
        $region45: #{tpu_custom_call.1} parent=43 // pred_check
          %p1133 = pneg %p174
        $region46: #{tpu_custom_call.1} parent=43 // pred_check_branch
          %1135 = sbr.rel (%p1133) target = $region48
        $region47: #{tpu_custom_call.1} parent=43 // pred_region
          %s1136 = smul.u32 20, %s20
          %s1137 = ssub.s32 38, %s1136
          %p1138 = scmp.lt.s32.totalorder %s1137, 20
          %s1139 = scalar_select %p1138, %s1137, 20
          %s1140 = smul.u32 128, %s1139
          %s1142 = ssub.s32 2560, %s1140
          %1143 = vsyncadd %s1129, %s1142
          %p1144 = scmp.ne.s32.totalorder 0, %s1140
          %s1145 = smul.addr %s1136, 128
          %s1146 = scalar_lea.hbm %s6, %s1145
          %s1147 = smul.u32 8, %s1139
          %s1148 = sshll.u32 %s1132, 4
          %s1149 = int_to_ptr.vmem [resolvable:$true] %s1148
          %s1150 = sshll.u32 %s1147, 4
          %1154 = dma.vmem_to_hbm [thread:$0]  (%p1144), %s1149, %s1150, %s1146, %s1129, 128, 128, 8
        $region48: #{tpu_custom_call.1} parent=43 // pred_fallthru
          _
      $region44: #{tpu_custom_call.1} parent=5 // pred_fallthru
        _
      %p1155 = scmp.le.s32.totalorder 2, %s15
      // Predicated region
      $region49: #{tpu_custom_call.1} parent=5 // pred_check
        %p1156 = pneg %p1155
      $region50: #{tpu_custom_call.1} parent=5 // pred_check_branch
        %1158 = sbr.rel (%p1156) target = $region52
      $region51: #{tpu_custom_call.1} parent=5 // pred_region
        %s1159 = ssub.s32 %s15, 2
        // Predicated region
        $region53: #{tpu_custom_call.1} parent=51 // pred_check
          %p1160 = pneg %p180
        $region54: #{tpu_custom_call.1} parent=51 // pred_check_branch
          %1162 = sbr.rel (%p1160) target = $region56
        $region55: #{tpu_custom_call.1} parent=51 // pred_region
          %s1163 = sand.u32 %s165, 1
          %s1164 = scalar_lea.sflag [#allocation3], %s1163
          %s1165 = sand.u32 %s165, 1
          %s1166 = smul.addr %s1165, 160
          %s1167 = scalar_lea.vmem [#allocation2], %s1166
          %1168 = dma.done %s1164, 2560
        $region56: #{tpu_custom_call.1} parent=51 // pred_fallthru
          _
      $region52: #{tpu_custom_call.1} parent=5 // pred_fallthru
        _
    $region6: #{tpu_custom_call.1} parent=1 // loop_footer
      %s19 = sadd.s32 1, %s15
    $region7: #{tpu_custom_call.1} parent=1 // loop_footer_branch
      %14 = sbr.rel target = $region3
    $region8: #{tpu_custom_call.1} parent=1 // loop_exit
      _
    %1169 = vsyncpa [#allocation3], 1
    %s1170 = scalar_lea.sflag [#allocation3], 1
    %1171 = vsyncpa %s1170, 1

</llo_original>
